<compile_context>
chip_gen: v6e
topology: v6e:2x2x1
jax: 0.10.0
libtpu: 0.0.40
codegen_flags: <defaults>
</compile_context>

<pallas_src>
import functools

import jax
import jax.numpy as jnp
from jax.experimental import pallas as pl
from jax.experimental.pallas import tpu as pltpu


def _round_up(x, m):
    return (x + m - 1) // m * m


def _vmem_capacity_bytes():
    # Generation-aware VMEM capacity (v5e/v6e: 128 MiB/TC, v7x: 64 MiB/TC).
    try:
        return int(pltpu.get_tpu_info().vmem_capacity_bytes)
    except Exception:
        return 64 * 1024 * 1024  # conservative, v7x-safe fallback


def _mlp_kernel(x_ref, w1_ref, b1_ref, w2_ref, b2_ref, w3_ref, b3_ref, o_ref):
    # x_ref : (tm, Dp)          w1_ref: (Dp, Hp)      b1_ref: (1, Hp)   f32
    # w2_ref: (L, Hp, Hp)       b2_ref: (L, 1, Hp)    f32
    # w3_ref: (Hp, Cp)          b3_ref: (1, Cp)       f32
    # o_ref : (tm, Cp)          f32
    w_dtype = w1_ref.dtype

    out = jnp.maximum(
        jnp.dot(x_ref[...], w1_ref[...], preferred_element_type=jnp.float32)
        + b1_ref[...],
        0.0,
    )

    num_layers = w2_ref.shape[0]

    def layer(l, out):
        residual = out
        z = (
            jnp.dot(out.astype(w_dtype), w2_ref[l],
                    preferred_element_type=jnp.float32)
            + b2_ref[l]
        )
        return jnp.maximum(z, 0.0) + residual

    if num_layers <= 8:
        # Shallow: static unroll; residual + relu ride the VPU under the MXU.
        for l in range(num_layers):
            out = layer(l, out)
    else:
        # Deep: rolled loop keeps live ranges to one layer's worth of vregs.
        out = jax.lax.fori_loop(0, num_layers, layer, out)

    logits = (
        jnp.dot(out.astype(w_dtype), w3_ref[...],
                preferred_element_type=jnp.float32)
        + b3_ref[...]
    )
    o_ref[...] = logits.astype(o_ref.dtype)


def prepare_params(w1, b1, w2, b2, w3, b3, *, param_dtype=jnp.float32):
    """Pad (and optionally cast) the parameters ONCE, outside the hot forward.

    Weight layout is (in_features, out_features): transposed from PyTorch's
    nn.Linear (out, in) — transpose when importing a checkpoint.
    Zero padding up to lane multiples of 128 is exact end-to-end (padded lanes
    stay zero through bias-add, ReLU, residual and the final matmul).
    Biases stay float32 for accuracy even when weights are bfloat16.
    """
    d, hidden = w1.shape
    num_layers = w2.shape[0]
    num_classes = w3.shape[1]

    dp = _round_up(d, 128)
    hp = _round_up(hidden, 128)
    cp = _round_up(num_classes, 128)

    w1p = jnp.pad(w1, ((0, dp - d), (0, hp - hidden))).astype(param_dtype)
    b1p = jnp.pad(b1, (0, hp - hidden)).reshape(1, hp).astype(jnp.float32)
    w2p = jnp.pad(
        w2, ((0, 0), (0, hp - hidden), (0, hp - hidden))
    ).astype(param_dtype)
    b2p = jnp.pad(
        b2, ((0, 0), (0, hp - hidden))
    ).reshape(num_layers, 1, hp).astype(jnp.float32)
    w3p = jnp.pad(
        w3, ((0, hp - hidden), (0, cp - num_classes))
    ).astype(param_dtype)
    b3p = jnp.pad(b3, (0, cp - num_classes)).reshape(1, cp).astype(jnp.float32)

    return (w1p, b1p, w2p, b2p, w3p, b3p)


@functools.partial(jax.jit, static_argnums=(1,))
def mlp_deep_residual_forward(padded_params, num_classes, x_nchw):
    """Fused forward pass. x_nchw: (b, 3, H, W); returns (b, num_classes) f32."""
    w1p, b1p, w2p, b2p, w3p, b3p = padded_params
    dp, hp = w1p.shape
    num_layers = w2p.shape[0]
    cp = w3p.shape[1]
    param_dtype = w1p.dtype

    b = x_nchw.shape[0]
    d = x_nchw.shape[1] * x_nchw.shape[2] * x_nchw.shape[3]
    assert d <= dp, "input feature dim larger than padded weight dim"

    x2d = x_nchw.reshape(b, d).astype(param_dtype)  # == torch x.view(b, -1)

    # Batch tile: up to 256 rows (fills the 256-wide MXU on v6e/v7x), but split
    # into >= 2 grid steps whenever b > 8 so the "parallel" batch axis can be
    # sharded across v7x's two TensorCores.
    bp8 = _round_up(b, 8)
    if bp8 <= 8:
        tm = bp8
    else:
        tm = min(256, _round_up((bp8 + 1) // 2, 8))
    bp = _round_up(b, tm)
    grid_m = bp // tm

    xp = jnp.pad(x2d, ((0, bp - b), (0, dp - d)))

    # VMEM budget: single-buffered resident weights + double-buffered x/out tiles.
    elt = jnp.dtype(param_dtype).itemsize
    weight_bytes = (
        elt * (dp * hp + num_layers * hp * hp + hp * cp)
        + 4 * (hp + num_layers * hp + cp)            # f32 biases
    )
    act_bytes = 2 * (elt * tm * dp + 4 * tm * cp)    # pipelined activation tiles
    vmem_cap = _vmem_capacity_bytes()
    vmem_limit = int(
        min(vmem_cap, max(32 * 1024 * 1024, int(1.5 * (weight_bytes + act_bytes))))
    )

    flops = 2 * bp * (dp * hp + num_layers * hp * hp + hp * cp)
    bytes_accessed = weight_bytes + elt * bp * dp + 4 * bp * cp
    cost = pl.CostEstimate(
        flops=flops, transcendentals=0, bytes_accessed=bytes_accessed
    )

    # Resident weights: constant index_map across the grid -> single-buffer them.
    resident = dict(pipeline_mode=pl.Buffered(1))
    in_specs = [
        pl.BlockSpec((tm, dp), lambda i: (i, 0)),                          # x tile
        pl.BlockSpec((dp, hp), lambda i: (0, 0), **resident),              # W1
        pl.BlockSpec((1, hp), lambda i: (0, 0), **resident),               # b1
        pl.BlockSpec((num_layers, hp, hp), lambda i: (0, 0, 0), **resident),  # W2
        pl.BlockSpec((num_layers, 1, hp), lambda i: (0, 0, 0), **resident),   # b2
        pl.BlockSpec((hp, cp), lambda i: (0, 0), **resident),              # W3
        pl.BlockSpec((1, cp), lambda i: (0, 0), **resident),               # b3
    ]

    out_padded = pl.pallas_call(
        _mlp_kernel,
        out_shape=jax.ShapeDtypeStruct((bp, cp), jnp.float32),
        grid=(grid_m,),
        in_specs=in_specs,
        out_specs=pl.BlockSpec((tm, cp), lambda i: (i, 0)),  # lane-dense stores
        compiler_params=pltpu.CompilerParams(
            dimension_semantics=("parallel",),
            vmem_limit_bytes=vmem_limit,
        ),
        cost_estimate=cost,
    )(xp, w1p, b1p, w2p, b2p, w3p, b3p)

    return out_padded[:b, :num_classes]


if __name__ == "__main__":
    # Small shapes consistent with the module: h = w = 16, hidden = 32, 3 layers.
    B, C_IN, H, W = 2, 3, 16, 16
    HIDDEN, NUM_LAYERS, NUM_CLASSES = 32, 3, 6
    D = C_IN * H * W  # 768

    key = jax.random.PRNGKey(0)
    keys = jax.random.split(key, 7)

    x = jax.random.normal(keys[0], (B, C_IN, H, W), dtype=jnp.float32)

    def uniform_init(k, shape, fan_in):
        bound = 1.0 / jnp.sqrt(jnp.float32(fan_in))
        return jax.random.uniform(k, shape, jnp.float32, -bound, bound)

    # Weights stored (in, out): transposed from PyTorch's nn.Linear (out, in).
    w1 = uniform_init(keys[1], (D, HIDDEN), D)
    b1 = uniform_init(keys[2], (HIDDEN,), D)
    w2 = uniform_init(keys[3], (NUM_LAYERS, HIDDEN, HIDDEN), HIDDEN)
    b2 = uniform_init(keys[4], (NUM_LAYERS, HIDDEN), HIDDEN)
    w3 = uniform_init(keys[5], (HIDDEN, NUM_CLASSES), HIDDEN)
    b3 = uniform_init(keys[6], (NUM_CLASSES,), HIDDEN)

    # Pad / lay out the parameters ONCE, outside the per-call forward.
    # (param_dtype=jnp.bfloat16 halves weight VMEM/HBM traffic if accuracy allows.)
    params = prepare_params(w1, b1, w2, b2, w3, b3, param_dtype=jnp.float32)

    out = mlp_deep_residual_forward(params, NUM_CLASSES, x)
    out = jax.block_until_ready(out)

    # Pure-JAX reference with identical semantics to the PyTorch forward.
    x2d = x.reshape(B, -1)
    ref = jnp.maximum(x2d @ w1 + b1, 0.0)
    for l in range(NUM_LAYERS):
        ref = jnp.maximum(ref @ w2[l] + b2[l], 0.0) + ref
    ref = ref @ w3 + b3

    assert out.shape == (B, NUM_CLASSES)
    assert jnp.allclose(out, ref, atol=1e-4, rtol=1e-4), float(
        jnp.max(jnp.abs(out - ref))
    )

    print("KERNEL_OK")
</pallas_src>

<mosaic_0001>
module attributes {stable_mosaic.version = 11 : i64} {
  func.func @_mlp_kernel(%arg0: i32, %arg1: memref<8x768xf32, #tpu.memory_space<vmem>>, %arg2: memref<768x128xf32, #tpu.memory_space<vmem>>, %arg3: memref<1x128xf32, #tpu.memory_space<vmem>>, %arg4: memref<3x128x128xf32, #tpu.memory_space<vmem>>, %arg5: memref<3x1x128xf32, #tpu.memory_space<vmem>>, %arg6: memref<128x128xf32, #tpu.memory_space<vmem>>, %arg7: memref<1x128xf32, #tpu.memory_space<vmem>>, %arg8: memref<8x128xf32, #tpu.memory_space<vmem>>) attributes {dimension_semantics = [#tpu.dimension_semantics<parallel>], iteration_bounds = array<i64: 1>, scalar_prefetch = 0 : i64, scratch_operands = 0 : i64, tpu.core_type = #tpu.core_type<tc>, window_params = [{transform_indices = @transform_0, window_bounds = array<i64: 8, 768>}, {pipeline_mode = #tpu.pipeline_mode<synchronous>, transform_indices = @transform_1, window_bounds = array<i64: 768, 128>}, {pipeline_mode = #tpu.pipeline_mode<synchronous>, transform_indices = @transform_2, window_bounds = array<i64: 1, 128>}, {pipeline_mode = #tpu.pipeline_mode<synchronous>, transform_indices = @transform_3, window_bounds = array<i64: 3, 128, 128>}, {pipeline_mode = #tpu.pipeline_mode<synchronous>, transform_indices = @transform_4, window_bounds = array<i64: 3, 1, 128>}, {pipeline_mode = #tpu.pipeline_mode<synchronous>, transform_indices = @transform_5, window_bounds = array<i64: 128, 128>}, {pipeline_mode = #tpu.pipeline_mode<synchronous>, transform_indices = @transform_6, window_bounds = array<i64: 1, 128>}, {transform_indices = @transform_7, window_bounds = array<i64: 8, 128>}]} {
    %c0 = arith.constant 0 : index
    %c0_0 = arith.constant 0 : index
    %0 = vector.load %arg1[%c0, %c0_0] : memref<8x768xf32, #tpu.memory_space<vmem>>, vector<8x768xf32>
    %c0_1 = arith.constant 0 : index
    %c0_2 = arith.constant 0 : index
    %1 = vector.load %arg2[%c0_1, %c0_2] : memref<768x128xf32, #tpu.memory_space<vmem>>, vector<768x128xf32>
    %cst = arith.constant dense<0.000000e+00> : vector<8x128xf32>
    %2 = tpu.matmul %0, %1, %cst {dimension_numbers = #tpu.dot_dimension_numbers<[1], [0], [0], [1], [0, 0, 1, 1], [], []>} : vector<8x768xf32>, vector<768x128xf32>, vector<8x128xf32> -> vector<8x128xf32>
    %c0_3 = arith.constant 0 : index
    %c0_4 = arith.constant 0 : index
    %3 = vector.load %arg3[%c0_3, %c0_4] : memref<1x128xf32, #tpu.memory_space<vmem>>, vector<1x128xf32>
    %4 = vector.broadcast %3 : vector<1x128xf32> to vector<8x128xf32>
    %5 = arith.addf %2, %4 : vector<8x128xf32>
    %cst_5 = arith.constant 0.000000e+00 : f32
    %6 = vector.broadcast %cst_5 : f32 to vector<8x128xf32>
    %7 = arith.maximumf %5, %6 : vector<8x128xf32>
    %c0_6 = arith.constant 0 : index
    %c0_7 = arith.constant 0 : index
    %c0_8 = arith.constant 0 : index
    %8 = vector.load %arg4[%c0_6, %c0_7, %c0_8] : memref<3x128x128xf32, #tpu.memory_space<vmem>>, vector<1x128x128xf32>
    %9 = vector.shape_cast %8 : vector<1x128x128xf32> to vector<128x128xf32>
    %cst_9 = arith.constant dense<0.000000e+00> : vector<8x128xf32>
    %10 = tpu.matmul %7, %9, %cst_9 {dimension_numbers = #tpu.dot_dimension_numbers<[1], [0], [0], [1], [0, 0, 1, 1], [], []>} : vector<8x128xf32>, vector<128x128xf32>, vector<8x128xf32> -> vector<8x128xf32>
    %c0_10 = arith.constant 0 : index
    %c0_11 = arith.constant 0 : index
    %c0_12 = arith.constant 0 : index
    %11 = vector.load %arg5[%c0_10, %c0_11, %c0_12] : memref<3x1x128xf32, #tpu.memory_space<vmem>>, vector<1x1x128xf32>
    %12 = vector.shape_cast %11 : vector<1x1x128xf32> to vector<1x128xf32>
    %13 = vector.broadcast %12 : vector<1x128xf32> to vector<8x128xf32>
    %14 = arith.addf %10, %13 : vector<8x128xf32>
    %cst_13 = arith.constant 0.000000e+00 : f32
    %15 = vector.broadcast %cst_13 : f32 to vector<8x128xf32>
    %16 = arith.maximumf %14, %15 : vector<8x128xf32>
    %17 = arith.addf %16, %7 : vector<8x128xf32>
    %c1 = arith.constant 1 : index
    %c0_14 = arith.constant 0 : index
    %c0_15 = arith.constant 0 : index
    %18 = vector.load %arg4[%c1, %c0_14, %c0_15] : memref<3x128x128xf32, #tpu.memory_space<vmem>>, vector<1x128x128xf32>
    %19 = vector.shape_cast %18 : vector<1x128x128xf32> to vector<128x128xf32>
    %cst_16 = arith.constant dense<0.000000e+00> : vector<8x128xf32>
    %20 = tpu.matmul %17, %19, %cst_16 {dimension_numbers = #tpu.dot_dimension_numbers<[1], [0], [0], [1], [0, 0, 1, 1], [], []>} : vector<8x128xf32>, vector<128x128xf32>, vector<8x128xf32> -> vector<8x128xf32>
    %c1_17 = arith.constant 1 : index
    %c0_18 = arith.constant 0 : index
    %c0_19 = arith.constant 0 : index
    %21 = vector.load %arg5[%c1_17, %c0_18, %c0_19] : memref<3x1x128xf32, #tpu.memory_space<vmem>>, vector<1x1x128xf32>
    %22 = vector.shape_cast %21 : vector<1x1x128xf32> to vector<1x128xf32>
    %23 = vector.broadcast %22 : vector<1x128xf32> to vector<8x128xf32>
    %24 = arith.addf %20, %23 : vector<8x128xf32>
    %cst_20 = arith.constant 0.000000e+00 : f32
    %25 = vector.broadcast %cst_20 : f32 to vector<8x128xf32>
    %26 = arith.maximumf %24, %25 : vector<8x128xf32>
    %27 = arith.addf %26, %17 : vector<8x128xf32>
    %c2 = arith.constant 2 : index
    %c0_21 = arith.constant 0 : index
    %c0_22 = arith.constant 0 : index
    %28 = vector.load %arg4[%c2, %c0_21, %c0_22] : memref<3x128x128xf32, #tpu.memory_space<vmem>>, vector<1x128x128xf32>
    %29 = vector.shape_cast %28 : vector<1x128x128xf32> to vector<128x128xf32>
    %cst_23 = arith.constant dense<0.000000e+00> : vector<8x128xf32>
    %30 = tpu.matmul %27, %29, %cst_23 {dimension_numbers = #tpu.dot_dimension_numbers<[1], [0], [0], [1], [0, 0, 1, 1], [], []>} : vector<8x128xf32>, vector<128x128xf32>, vector<8x128xf32> -> vector<8x128xf32>
    %c2_24 = arith.constant 2 : index
    %c0_25 = arith.constant 0 : index
    %c0_26 = arith.constant 0 : index
    %31 = vector.load %arg5[%c2_24, %c0_25, %c0_26] : memref<3x1x128xf32, #tpu.memory_space<vmem>>, vector<1x1x128xf32>
    %32 = vector.shape_cast %31 : vector<1x1x128xf32> to vector<1x128xf32>
    %33 = vector.broadcast %32 : vector<1x128xf32> to vector<8x128xf32>
    %34 = arith.addf %30, %33 : vector<8x128xf32>
    %cst_27 = arith.constant 0.000000e+00 : f32
    %35 = vector.broadcast %cst_27 : f32 to vector<8x128xf32>
    %36 = arith.maximumf %34, %35 : vector<8x128xf32>
    %37 = arith.addf %36, %27 : vector<8x128xf32>
    %c0_28 = arith.constant 0 : index
    %c0_29 = arith.constant 0 : index
    %38 = vector.load %arg6[%c0_28, %c0_29] : memref<128x128xf32, #tpu.memory_space<vmem>>, vector<128x128xf32>
    %cst_30 = arith.constant dense<0.000000e+00> : vector<8x128xf32>
    %39 = tpu.matmul %37, %38, %cst_30 {dimension_numbers = #tpu.dot_dimension_numbers<[1], [0], [0], [1], [0, 0, 1, 1], [], []>} : vector<8x128xf32>, vector<128x128xf32>, vector<8x128xf32> -> vector<8x128xf32>
    %c0_31 = arith.constant 0 : index
    %c0_32 = arith.constant 0 : index
    %40 = vector.load %arg7[%c0_31, %c0_32] : memref<1x128xf32, #tpu.memory_space<vmem>>, vector<1x128xf32>
    %41 = vector.broadcast %40 : vector<1x128xf32> to vector<8x128xf32>
    %42 = arith.addf %39, %41 : vector<8x128xf32>
    %c0_33 = arith.constant 0 : index
    %c0_34 = arith.constant 0 : index
    %43 = vector.load %arg8[%c0_33, %c0_34] : memref<8x128xf32, #tpu.memory_space<vmem>>, vector<8x128xf32>
    tpu.vector_store %arg8[%c0_33, %c0_34], %42 {strides = array<i32>} : memref<8x128xf32, #tpu.memory_space<vmem>>, vector<8x128xf32>,
    return
  }
  func.func @transform_0(%arg0: i32) -> (i32, i32) {
    %c0_i32 = arith.constant 0 : i32
    %c0_i32_0 = arith.constant 0 : i32
    return %arg0, %c0_i32 : i32, i32
  }
  func.func @transform_1(%arg0: i32) -> (i32, i32) {
    %c0_i32 = arith.constant 0 : i32
    %c0_i32_0 = arith.constant 0 : i32
    %c0_i32_1 = arith.constant 0 : i32
    return %c0_i32, %c0_i32_0 : i32, i32
  }
  func.func @transform_2(%arg0: i32) -> (i32, i32) {
    %c0_i32 = arith.constant 0 : i32
    %c0_i32_0 = arith.constant 0 : i32
    %c0_i32_1 = arith.constant 0 : i32
    return %c0_i32, %c0_i32_0 : i32, i32
  }
  func.func @transform_3(%arg0: i32) -> (i32, i32, i32) {
    %c0_i32 = arith.constant 0 : i32
    %c0_i32_0 = arith.constant 0 : i32
    %c0_i32_1 = arith.constant 0 : i32
    %c0_i32_2 = arith.constant 0 : i32
    return %c0_i32, %c0_i32_0, %c0_i32_1 : i32, i32, i32
  }
  func.func @transform_4(%arg0: i32) -> (i32, i32, i32) {
    %c0_i32 = arith.constant 0 : i32
    %c0_i32_0 = arith.constant 0 : i32
    %c0_i32_1 = arith.constant 0 : i32
    %c0_i32_2 = arith.constant 0 : i32
    return %c0_i32, %c0_i32_0, %c0_i32_1 : i32, i32, i32
  }
  func.func @transform_5(%arg0: i32) -> (i32, i32) {
    %c0_i32 = arith.constant 0 : i32
    %c0_i32_0 = arith.constant 0 : i32
    %c0_i32_1 = arith.constant 0 : i32
    return %c0_i32, %c0_i32_0 : i32, i32
  }
  func.func @transform_6(%arg0: i32) -> (i32, i32) {
    %c0_i32 = arith.constant 0 : i32
    %c0_i32_0 = arith.constant 0 : i32
    %c0_i32_1 = arith.constant 0 : i32
    return %c0_i32, %c0_i32_0 : i32, i32
  }
  func.func @transform_7(%arg0: i32) -> (i32, i32) {
    %c0_i32 = arith.constant 0 : i32
    %c0_i32_0 = arith.constant 0 : i32
    return %arg0, %c0_i32 : i32, i32
  }
}

</mosaic_0001>

<llo_original>
// kernel: mlp_deep_residual_forward.1
$region0: #{mlp_deep_residual_forward.1}
  #allocation0 [shape = 'u32[]', space=smem, size = 0x4, offset = 0x4, fixed_abs, tag = 'smem constant byte address 0x4 - core index']
  #allocation1 [shape = 'u32[144,128]{1,0:T(1,128)}', space=vmem, size = 0x12000, scoped, tag = 'internal scratch']
  %s0 = inlined_call_operand.vmem [shape: f32[8,768], index: 0, kind: input, shape index: {}]
  %s1 = inlined_call_operand.hbm [shape: f32[768,128], index: 1, kind: input, shape index: {}]
  %s2 = inlined_call_operand.vmem [shape: f32[1,128], index: 2, kind: input, shape index: {}]
  %s3 = inlined_call_operand.hbm [shape: f32[3,128,128], index: 3, kind: input, shape index: {}]
  %s4 = inlined_call_operand.vmem [shape: f32[3,1,128], index: 4, kind: input, shape index: {}]
  %s5 = inlined_call_operand.vmem [shape: f32[128,128], index: 5, kind: input, shape index: {}]
  %s6 = inlined_call_operand.vmem [shape: f32[1,128], index: 6, kind: input, shape index: {}]
  %s7 = inlined_call_operand.vmem [shape: f32[8,128], index: 7, kind: output, shape index: {}]
  %s8 = sld [smem:[#allocation0]]
  $region46: #{mlp_deep_residual_forward.1} parent=0
    _
  %s10 = ssub.s32 1, %s8
  %s11 = scalar_select 0, %s10, %s8
  $region1: #{mlp_deep_residual_forward.1} parent=0
    #allocation2 [shape = 'u8[393216]{0}', space=vmem, size = 0x60000, scoped, tag = 'input window, operand 1, single buffered']
    #allocation3 [shape = 's32[1]{0}', space=sflag, size = 0x4, scoped, tag = 'scoped memory for mlp_deep_residual_forward.1']
    #allocation4 [shape = 'u8[196608]{0}', space=vmem, size = 0x30000, scoped, tag = 'input window, operand 3, single buffered']
    #allocation5 [shape = 's32[1]{0}', space=sflag, size = 0x4, scoped, tag = 'scoped memory for mlp_deep_residual_forward.1']
    %12 = vsyncpa [#allocation3], 0
    %13 = vsyncpa [#allocation5], 0
    // Predicated region
    $region2: #{mlp_deep_residual_forward.1} parent=1 // pred_check
      _
    $region3: #{mlp_deep_residual_forward.1} parent=1 // pred_check_branch
      %15 = sbr.rel (0) target = $region5
    $region4: #{mlp_deep_residual_forward.1} parent=1 // pred_region
      _
    $region5: #{mlp_deep_residual_forward.1} parent=1 // pred_fallthru
      _
    // Predicated region
    $region6: #{mlp_deep_residual_forward.1} parent=1 // pred_check
      _
    $region7: #{mlp_deep_residual_forward.1} parent=1 // pred_check_branch
      %17 = sbr.rel (0) target = $region9
    $region8: #{mlp_deep_residual_forward.1} parent=1 // pred_region
      %s19 = ssub.s32 12288, 12288
      %20 = vsyncadd [#allocation3], %s19
      %s21 = sshll.u32 [#allocation2], 4
      %s22 = int_to_ptr.vmem [resolvable:$true] %s21
      %27 = dma.hbm_to_vmem [thread:$0]  %s1, 12288, %s22, [#allocation3], 128, 128, 8
    $region9: #{mlp_deep_residual_forward.1} parent=1 // pred_fallthru
      _
    // Predicated region
    $region10: #{mlp_deep_residual_forward.1} parent=1 // pred_check
      _
    $region11: #{mlp_deep_residual_forward.1} parent=1 // pred_check_branch
      %29 = sbr.rel (0) target = $region13
    $region12: #{mlp_deep_residual_forward.1} parent=1 // pred_region
      _
    $region13: #{mlp_deep_residual_forward.1} parent=1 // pred_fallthru
      _
    // Predicated region
    $region14: #{mlp_deep_residual_forward.1} parent=1 // pred_check
      _
    $region15: #{mlp_deep_residual_forward.1} parent=1 // pred_check_branch
      %31 = sbr.rel (0) target = $region17
    $region16: #{mlp_deep_residual_forward.1} parent=1 // pred_region
      %s33 = ssub.s32 6144, 6144
      %34 = vsyncadd [#allocation5], %s33
      %s35 = sshll.u32 [#allocation4], 4
      %s36 = int_to_ptr.vmem [resolvable:$true] %s35
      %41 = dma.hbm_to_vmem [thread:$0]  %s3, 6144, %s36, [#allocation5], 128, 128, 8
    $region17: #{mlp_deep_residual_forward.1} parent=1 // pred_fallthru
      _
    // Predicated region
    $region18: #{mlp_deep_residual_forward.1} parent=1 // pred_check
      _
    $region19: #{mlp_deep_residual_forward.1} parent=1 // pred_check_branch
      %43 = sbr.rel (0) target = $region21
    $region20: #{mlp_deep_residual_forward.1} parent=1 // pred_region
      _
    $region21: #{mlp_deep_residual_forward.1} parent=1 // pred_fallthru
      _
    // Predicated region
    $region22: #{mlp_deep_residual_forward.1} parent=1 // pred_check
      _
    $region23: #{mlp_deep_residual_forward.1} parent=1 // pred_check_branch
      %45 = sbr.rel (0) target = $region25
    $region24: #{mlp_deep_residual_forward.1} parent=1 // pred_region
      _
    $region25: #{mlp_deep_residual_forward.1} parent=1 // pred_fallthru
      _
    // Predicated region
    $region26: #{mlp_deep_residual_forward.1} parent=1 // pred_check
      _
    $region27: #{mlp_deep_residual_forward.1} parent=1 // pred_check_branch
      %47 = sbr.rel (0) target = $region29
    $region28: #{mlp_deep_residual_forward.1} parent=1 // pred_region
      _
    $region29: #{mlp_deep_residual_forward.1} parent=1 // pred_fallthru
      _
    // Predicated region
    $region30: #{mlp_deep_residual_forward.1} parent=1 // pred_check
      _
    $region31: #{mlp_deep_residual_forward.1} parent=1 // pred_check_branch
      %49 = sbr.rel (0) target = $region33
    $region32: #{mlp_deep_residual_forward.1} parent=1 // pred_region
      %50 = dma.done [#allocation3], 12288
    $region33: #{mlp_deep_residual_forward.1} parent=1 // pred_fallthru
      _
    // Predicated region
    $region34: #{mlp_deep_residual_forward.1} parent=1 // pred_check
      _
    $region35: #{mlp_deep_residual_forward.1} parent=1 // pred_check_branch
      %52 = sbr.rel (0) target = $region37
    $region36: #{mlp_deep_residual_forward.1} parent=1 // pred_region
      %53 = dma.done [#allocation5], 6144
    $region37: #{mlp_deep_residual_forward.1} parent=1 // pred_fallthru
      _
    %v54 = vld [vmem:[%s0] sm:$0xff]
    %v55 = vld [vmem:[%s0 + $0x8] sm:$0xff]
    %v56 = vld [vmem:[%s0 + $0x10] sm:$0xff]
    %v57 = vld [vmem:[%s0 + $0x18] sm:$0xff]
    %v58 = vld [vmem:[%s0 + $0x20] sm:$0xff]
    %v59 = vld [vmem:[%s0 + $0x28] sm:$0xff]
    %v60 = vld [vmem:[#allocation2] sm:$0xff]
    %v61 = vld [vmem:[#allocation2 + $0x8] sm:$0xff]
    %v62 = vld [vmem:[#allocation2 + $0x10] sm:$0xff]
    %v63 = vld [vmem:[#allocation2 + $0x18] sm:$0xff]
    %v64 = vld [vmem:[#allocation2 + $0x20] sm:$0xff]
    %v65 = vld [vmem:[#allocation2 + $0x28] sm:$0xff]
    %v66 = vld [vmem:[#allocation2 + $0x30] sm:$0xff]
    %v67 = vld [vmem:[#allocation2 + $0x38] sm:$0xff]
    %v68 = vld [vmem:[#allocation2 + $0x40] sm:$0xff]
    %v69 = vld [vmem:[#allocation2 + $0x48] sm:$0xff]
    %v70 = vld [vmem:[#allocation2 + $0x50] sm:$0xff]
    %v71 = vld [vmem:[#allocation2 + $0x58] sm:$0xff]
    %v72 = vld [vmem:[#allocation2 + $0x60] sm:$0xff]
    %v73 = vld [vmem:[#allocation2 + $0x68] sm:$0xff]
    %v74 = vld [vmem:[#allocation2 + $0x70] sm:$0xff]
    %v75 = vld [vmem:[#allocation2 + $0x78] sm:$0xff]
    %v76 = vld [vmem:[#allocation2 + $0x80] sm:$0xff]
    %v77 = vld [vmem:[#allocation2 + $0x88] sm:$0xff]
    %v78 = vld [vmem:[#allocation2 + $0x90] sm:$0xff]
    %v79 = vld [vmem:[#allocation2 + $0x98] sm:$0xff]
    %v80 = vld [vmem:[#allocation2 + $0xa0] sm:$0xff]
    %v81 = vld [vmem:[#allocation2 + $0xa8] sm:$0xff]
    %v82 = vld [vmem:[#allocation2 + $0xb0] sm:$0xff]
    %v83 = vld [vmem:[#allocation2 + $0xb8] sm:$0xff]
    %v84 = vld [vmem:[#allocation2 + $0xc0] sm:$0xff]
    %v85 = vld [vmem:[#allocation2 + $0xc8] sm:$0xff]
    %v86 = vld [vmem:[#allocation2 + $0xd0] sm:$0xff]
    %v87 = vld [vmem:[#allocation2 + $0xd8] sm:$0xff]
    %v88 = vld [vmem:[#allocation2 + $0xe0] sm:$0xff]
    %v89 = vld [vmem:[#allocation2 + $0xe8] sm:$0xff]
    %v90 = vld [vmem:[#allocation2 + $0xf0] sm:$0xff]
    %v91 = vld [vmem:[#allocation2 + $0xf8] sm:$0xff]
    %v92 = vld [vmem:[#allocation2 + $0x100] sm:$0xff]
    %v93 = vld [vmem:[#allocation2 + $0x108] sm:$0xff]
    %v94 = vld [vmem:[#allocation2 + $0x110] sm:$0xff]
    %v95 = vld [vmem:[#allocation2 + $0x118] sm:$0xff]
    %v96 = vld [vmem:[#allocation2 + $0x120] sm:$0xff]
    %v97 = vld [vmem:[#allocation2 + $0x128] sm:$0xff]
    %v98 = vld [vmem:[#allocation2 + $0x130] sm:$0xff]
    %v99 = vld [vmem:[#allocation2 + $0x138] sm:$0xff]
    %v100 = vld [vmem:[#allocation2 + $0x140] sm:$0xff]
    %v101 = vld [vmem:[#allocation2 + $0x148] sm:$0xff]
    %v102 = vld [vmem:[#allocation2 + $0x150] sm:$0xff]
    %v103 = vld [vmem:[#allocation2 + $0x158] sm:$0xff]
    %v104 = vld [vmem:[#allocation2 + $0x160] sm:$0xff]
    %v105 = vld [vmem:[#allocation2 + $0x168] sm:$0xff]
    %v106 = vld [vmem:[#allocation2 + $0x170] sm:$0xff]
    %v107 = vld [vmem:[#allocation2 + $0x178] sm:$0xff]
    %v108 = vld [vmem:[#allocation2 + $0x180] sm:$0xff]
    %v109 = vld [vmem:[#allocation2 + $0x188] sm:$0xff]
    %v110 = vld [vmem:[#allocation2 + $0x190] sm:$0xff]
    %v111 = vld [vmem:[#allocation2 + $0x198] sm:$0xff]
    %v112 = vld [vmem:[#allocation2 + $0x1a0] sm:$0xff]
    %v113 = vld [vmem:[#allocation2 + $0x1a8] sm:$0xff]
    %v114 = vld [vmem:[#allocation2 + $0x1b0] sm:$0xff]
    %v115 = vld [vmem:[#allocation2 + $0x1b8] sm:$0xff]
    %v116 = vld [vmem:[#allocation2 + $0x1c0] sm:$0xff]
    %v117 = vld [vmem:[#allocation2 + $0x1c8] sm:$0xff]
    %v118 = vld [vmem:[#allocation2 + $0x1d0] sm:$0xff]
    %v119 = vld [vmem:[#allocation2 + $0x1d8] sm:$0xff]
    %v120 = vld [vmem:[#allocation2 + $0x1e0] sm:$0xff]
    %v121 = vld [vmem:[#allocation2 + $0x1e8] sm:$0xff]
    %v122 = vld [vmem:[#allocation2 + $0x1f0] sm:$0xff]
    %v123 = vld [vmem:[#allocation2 + $0x1f8] sm:$0xff]
    %v124 = vld [vmem:[#allocation2 + $0x200] sm:$0xff]
    %v125 = vld [vmem:[#allocation2 + $0x208] sm:$0xff]
    %v126 = vld [vmem:[#allocation2 + $0x210] sm:$0xff]
    %v127 = vld [vmem:[#allocation2 + $0x218] sm:$0xff]
    %v128 = vld [vmem:[#allocation2 + $0x220] sm:$0xff]
    %v129 = vld [vmem:[#allocation2 + $0x228] sm:$0xff]
    %v130 = vld [vmem:[#allocation2 + $0x230] sm:$0xff]
    %v131 = vld [vmem:[#allocation2 + $0x238] sm:$0xff]
    %v132 = vld [vmem:[#allocation2 + $0x240] sm:$0xff]
    %v133 = vld [vmem:[#allocation2 + $0x248] sm:$0xff]
    %v134 = vld [vmem:[#allocation2 + $0x250] sm:$0xff]
    %v135 = vld [vmem:[#allocation2 + $0x258] sm:$0xff]
    %v136 = vld [vmem:[#allocation2 + $0x260] sm:$0xff]
    %v137 = vld [vmem:[#allocation2 + $0x268] sm:$0xff]
    %v138 = vld [vmem:[#allocation2 + $0x270] sm:$0xff]
    %v139 = vld [vmem:[#allocation2 + $0x278] sm:$0xff]
    %v140 = vld [vmem:[#allocation2 + $0x280] sm:$0xff]
    %v141 = vld [vmem:[#allocation2 + $0x288] sm:$0xff]
    %v142 = vld [vmem:[#allocation2 + $0x290] sm:$0xff]
    %v143 = vld [vmem:[#allocation2 + $0x298] sm:$0xff]
    %v144 = vld [vmem:[#allocation2 + $0x2a0] sm:$0xff]
    %v145 = vld [vmem:[#allocation2 + $0x2a8] sm:$0xff]
    %v146 = vld [vmem:[#allocation2 + $0x2b0] sm:$0xff]
    %v147 = vld [vmem:[#allocation2 + $0x2b8] sm:$0xff]
    %v148 = vld [vmem:[#allocation2 + $0x2c0] sm:$0xff]
    %v149 = vld [vmem:[#allocation2 + $0x2c8] sm:$0xff]
    %v150 = vld [vmem:[#allocation2 + $0x2d0] sm:$0xff]
    %v151 = vld [vmem:[#allocation2 + $0x2d8] sm:$0xff]
    %v152 = vld [vmem:[#allocation2 + $0x2e0] sm:$0xff]
    %v153 = vld [vmem:[#allocation2 + $0x2e8] sm:$0xff]
    %v154 = vld [vmem:[#allocation2 + $0x2f0] sm:$0xff]
    %v155 = vld [vmem:[#allocation2 + $0x2f8] sm:$0xff]
    %v156 = vld [vmem:[%s2] sm:$0x1]
    %v158 = vlaneseq
    %v159 = vshrl.u32 %v158, 7
    %v160 = vsub.s32 0, %v159
    %v161 = vrot.slane %v156, %v160
    %163 = vmatprep.subr.mxu0 0.0
    %164 = vmatpush1.msra.mxu0 %v75
    %165 = vmatprep.subr.mxu0 0.0
    %166 = vmatpush1.msra.mxu0 %v74
    %167 = vmatprep.subr.mxu0 0.0
    %168 = vmatpush1.msra.mxu0 %v73
    %169 = vmatprep.subr.mxu0 0.0
    %170 = vmatpush1.msra.mxu0 %v72
    %171 = vmatprep.subr.mxu0 0.0
    %172 = vmatpush1.msra.mxu0 %v71
    %173 = vmatprep.subr.mxu0 0.0
    %174 = vmatpush1.msra.mxu0 %v70
    %175 = vmatprep.subr.mxu0 0.0
    %176 = vmatpush1.msra.mxu0 %v69
    %177 = vmatprep.subr.mxu0 0.0
    %178 = vmatpush1.msra.mxu0 %v68
    %179 = vmatprep.subr.mxu0 0.0
    %180 = vmatpush1.msra.mxu0 %v67
    %181 = vmatprep.subr.mxu0 0.0
    %182 = vmatpush1.msra.mxu0 %v66
    %183 = vmatprep.subr.mxu0 0.0
    %184 = vmatpush1.msra.mxu0 %v65
    %185 = vmatprep.subr.mxu0 0.0
    %186 = vmatpush1.msra.mxu0 %v64
    %187 = vmatprep.subr.mxu0 0.0
    %188 = vmatpush1.msra.mxu0 %v63
    %189 = vmatprep.subr.mxu0 0.0
    %190 = vmatpush1.msra.mxu0 %v62
    %191 = vmatprep.subr.mxu0 0.0
    %192 = vmatpush1.msra.mxu0 %v61
    %193 = vmatprep.subr.mxu0 0.0
    %194 = vmatpush1.msra.mxu0 %v60
    %195 = vmatprep.subr.mxu0 0.0
    %196 = vmatpush2.msra.mxu0 %v91
    %197 = vmatprep.subr.mxu0 0.0
    %198 = vmatpush2.msra.mxu0 %v90
    %199 = vmatprep.subr.mxu0 0.0
    %200 = vmatpush2.msra.mxu0 %v89
    %201 = vmatprep.subr.mxu0 0.0
    %202 = vmatpush2.msra.mxu0 %v88
    %203 = vmatprep.subr.mxu0 0.0
    %204 = vmatpush2.msra.mxu0 %v87
    %205 = vmatprep.subr.mxu0 0.0
    %206 = vmatpush2.msra.mxu0 %v86
    %207 = vmatprep.subr.mxu0 0.0
    %208 = vmatpush2.msra.mxu0 %v85
    %209 = vmatprep.subr.mxu0 0.0
    %210 = vmatpush2.msra.mxu0 %v84
    %211 = vmatprep.subr.mxu0 0.0
    %212 = vmatpush2.msra.mxu0 %v83
    %213 = vmatprep.subr.mxu0 0.0
    %214 = vmatpush2.msra.mxu0 %v82
    %215 = vmatprep.subr.mxu0 0.0
    %216 = vmatpush2.msra.mxu0 %v81
    %217 = vmatprep.subr.mxu0 0.0
    %218 = vmatpush2.msra.mxu0 %v80
    %219 = vmatprep.subr.mxu0 0.0
    %220 = vmatpush2.msra.mxu0 %v79
    %221 = vmatprep.subr.mxu0 0.0
    %222 = vmatpush2.msra.mxu0 %v78
    %223 = vmatprep.subr.mxu0 0.0
    %224 = vmatpush2.msra.mxu0 %v77
    %225 = vmatprep.subr.mxu0 0.0
    %226 = vmatpush2.msra.mxu0 %v76
    %227 = vmatprep.mubr.f32.mxu0 %v55
    %228 = vmatmul.mubr.f32.gmra.mxu0 %v54
    %v229 = vpop.f32.mrf.mxu0
    %v230 = vadd.f32 %v161, %v229
    %v231 = vpop.f32.mrf.mxu0
    %232 = vdwg.mxu0
    %233 = vmatprep.subr.mxu0 0.0
    %234 = vmatpush1.msra.mxu0 %v107
    %235 = vmatprep.subr.mxu0 0.0
    %236 = vmatpush1.msra.mxu0 %v106
    %237 = vmatprep.subr.mxu0 0.0
    %238 = vmatpush1.msra.mxu0 %v105
    %239 = vmatprep.subr.mxu0 0.0
    %240 = vmatpush1.msra.mxu0 %v104
    %241 = vmatprep.subr.mxu0 0.0
    %242 = vmatpush1.msra.mxu0 %v103
    %243 = vmatprep.subr.mxu0 0.0
    %244 = vmatpush1.msra.mxu0 %v102
    %245 = vmatprep.subr.mxu0 0.0
    %246 = vmatpush1.msra.mxu0 %v101
    %247 = vmatprep.subr.mxu0 0.0
    %248 = vmatpush1.msra.mxu0 %v100
    %249 = vmatprep.subr.mxu0 0.0
    %250 = vmatpush1.msra.mxu0 %v99
    %251 = vmatprep.subr.mxu0 0.0
    %252 = vmatpush1.msra.mxu0 %v98
    %253 = vmatprep.subr.mxu0 0.0
    %254 = vmatpush1.msra.mxu0 %v97
    %255 = vmatprep.subr.mxu0 0.0
    %256 = vmatpush1.msra.mxu0 %v96
    %257 = vmatprep.subr.mxu0 0.0
    %258 = vmatpush1.msra.mxu0 %v95
    %259 = vmatprep.subr.mxu0 0.0
    %260 = vmatpush1.msra.mxu0 %v94
    %261 = vmatprep.subr.mxu0 0.0
    %262 = vmatpush1.msra.mxu0 %v93
    %263 = vmatprep.subr.mxu0 0.0
    %264 = vmatpush1.msra.mxu0 %v92
    %265 = vmatprep.subr.mxu0 0.0
    %266 = vmatpush2.msra.mxu0 %v123
    %267 = vmatprep.subr.mxu0 0.0
    %268 = vmatpush2.msra.mxu0 %v122
    %269 = vmatprep.subr.mxu0 0.0
    %270 = vmatpush2.msra.mxu0 %v121
    %271 = vmatprep.subr.mxu0 0.0
    %272 = vmatpush2.msra.mxu0 %v120
    %273 = vmatprep.subr.mxu0 0.0
    %274 = vmatpush2.msra.mxu0 %v119
    %275 = vmatprep.subr.mxu0 0.0
    %276 = vmatpush2.msra.mxu0 %v118
    %277 = vmatprep.subr.mxu0 0.0
    %278 = vmatpush2.msra.mxu0 %v117
    %279 = vmatprep.subr.mxu0 0.0
    %280 = vmatpush2.msra.mxu0 %v116
    %281 = vmatprep.subr.mxu0 0.0
    %282 = vmatpush2.msra.mxu0 %v115
    %283 = vmatprep.subr.mxu0 0.0
    %284 = vmatpush2.msra.mxu0 %v114
    %285 = vmatprep.subr.mxu0 0.0
    %286 = vmatpush2.msra.mxu0 %v113
    %287 = vmatprep.subr.mxu0 0.0
    %288 = vmatpush2.msra.mxu0 %v112
    %289 = vmatprep.subr.mxu0 0.0
    %290 = vmatpush2.msra.mxu0 %v111
    %291 = vmatprep.subr.mxu0 0.0
    %292 = vmatpush2.msra.mxu0 %v110
    %293 = vmatprep.subr.mxu0 0.0
    %294 = vmatpush2.msra.mxu0 %v109
    %295 = vmatprep.subr.mxu0 0.0
    %296 = vmatpush2.msra.mxu0 %v108
    %297 = vmatprep.mubr.f32.mxu0 %v57
    %298 = vmatmul.mubr.f32.gmra.mxu0 %v56
    %v299 = vpop.f32.mrf.mxu0
    %v300 = vadd.f32 %v230, %v299
    %v301 = vpop.f32.mrf.mxu0
    %302 = vdwg.mxu0
    %303 = vmatprep.subr.mxu0 0.0
    %304 = vmatpush1.msra.mxu0 %v139
    %305 = vmatprep.subr.mxu0 0.0
    %306 = vmatpush1.msra.mxu0 %v138
    %307 = vmatprep.subr.mxu0 0.0
    %308 = vmatpush1.msra.mxu0 %v137
    %309 = vmatprep.subr.mxu0 0.0
    %310 = vmatpush1.msra.mxu0 %v136
    %311 = vmatprep.subr.mxu0 0.0
    %312 = vmatpush1.msra.mxu0 %v135
    %313 = vmatprep.subr.mxu0 0.0
    %314 = vmatpush1.msra.mxu0 %v134
    %315 = vmatprep.subr.mxu0 0.0
    %316 = vmatpush1.msra.mxu0 %v133
    %317 = vmatprep.subr.mxu0 0.0
    %318 = vmatpush1.msra.mxu0 %v132
    %319 = vmatprep.subr.mxu0 0.0
    %320 = vmatpush1.msra.mxu0 %v131
    %321 = vmatprep.subr.mxu0 0.0
    %322 = vmatpush1.msra.mxu0 %v130
    %323 = vmatprep.subr.mxu0 0.0
    %324 = vmatpush1.msra.mxu0 %v129
    %325 = vmatprep.subr.mxu0 0.0
    %326 = vmatpush1.msra.mxu0 %v128
    %327 = vmatprep.subr.mxu0 0.0
    %328 = vmatpush1.msra.mxu0 %v127
    %329 = vmatprep.subr.mxu0 0.0
    %330 = vmatpush1.msra.mxu0 %v126
    %331 = vmatprep.subr.mxu0 0.0
    %332 = vmatpush1.msra.mxu0 %v125
    %333 = vmatprep.subr.mxu0 0.0
    %334 = vmatpush1.msra.mxu0 %v124
    %335 = vmatprep.subr.mxu0 0.0
    %336 = vmatpush2.msra.mxu0 %v155
    %337 = vmatprep.subr.mxu0 0.0
    %338 = vmatpush2.msra.mxu0 %v154
    %339 = vmatprep.subr.mxu0 0.0
    %340 = vmatpush2.msra.mxu0 %v153
    %341 = vmatprep.subr.mxu0 0.0
    %342 = vmatpush2.msra.mxu0 %v152
    %343 = vmatprep.subr.mxu0 0.0
    %344 = vmatpush2.msra.mxu0 %v151
    %345 = vmatprep.subr.mxu0 0.0
    %346 = vmatpush2.msra.mxu0 %v150
    %347 = vmatprep.subr.mxu0 0.0
    %348 = vmatpush2.msra.mxu0 %v149
    %349 = vmatprep.subr.mxu0 0.0
    %350 = vmatpush2.msra.mxu0 %v148
    %351 = vmatprep.subr.mxu0 0.0
    %352 = vmatpush2.msra.mxu0 %v147
    %353 = vmatprep.subr.mxu0 0.0
    %354 = vmatpush2.msra.mxu0 %v146
    %355 = vmatprep.subr.mxu0 0.0
    %356 = vmatpush2.msra.mxu0 %v145
    %357 = vmatprep.subr.mxu0 0.0
    %358 = vmatpush2.msra.mxu0 %v144
    %359 = vmatprep.subr.mxu0 0.0
    %360 = vmatpush2.msra.mxu0 %v143
    %361 = vmatprep.subr.mxu0 0.0
    %362 = vmatpush2.msra.mxu0 %v142
    %363 = vmatprep.subr.mxu0 0.0
    %364 = vmatpush2.msra.mxu0 %v141
    %365 = vmatprep.subr.mxu0 0.0
    %366 = vmatpush2.msra.mxu0 %v140
    %367 = vmatprep.mubr.f32.mxu0 %v59
    %368 = vmatmul.mubr.f32.gmra.mxu0 %v58
    %v369 = vpop.f32.mrf.mxu0
    %v370 = vadd.f32 %v300, %v369
    %v371 = vpop.f32.mrf.mxu0
    %372 = vdwg.mxu0
    %v373 = vmax.f32 %v370, 0.0
    %v374 = vld [vmem:[#allocation4] sm:$0xff]
    %v375 = vld [vmem:[#allocation4 + $0x8] sm:$0xff]
    %v376 = vld [vmem:[#allocation4 + $0x10] sm:$0xff]
    %v377 = vld [vmem:[#allocation4 + $0x18] sm:$0xff]
    %v378 = vld [vmem:[#allocation4 + $0x20] sm:$0xff]
    %v379 = vld [vmem:[#allocation4 + $0x28] sm:$0xff]
    %v380 = vld [vmem:[#allocation4 + $0x30] sm:$0xff]
    %v381 = vld [vmem:[#allocation4 + $0x38] sm:$0xff]
    %v382 = vld [vmem:[#allocation4 + $0x40] sm:$0xff]
    %v383 = vld [vmem:[#allocation4 + $0x48] sm:$0xff]
    %v384 = vld [vmem:[#allocation4 + $0x50] sm:$0xff]
    %v385 = vld [vmem:[#allocation4 + $0x58] sm:$0xff]
    %v386 = vld [vmem:[#allocation4 + $0x60] sm:$0xff]
    %v387 = vld [vmem:[#allocation4 + $0x68] sm:$0xff]
    %v388 = vld [vmem:[#allocation4 + $0x70] sm:$0xff]
    %v389 = vld [vmem:[#allocation4 + $0x78] sm:$0xff]
    %v390 = vld [vmem:[%s4] sm:$0x1]
    %v392 = vlaneseq
    %v393 = vshrl.u32 %v392, 7
    %v394 = vsub.s32 0, %v393
    %v395 = vrot.slane %v390, %v394
    %397 = vmatprep.subr.mxu0 0.0
    %398 = vmatpush1.msra.mxu0 %v389
    %399 = vmatprep.subr.mxu0 0.0
    %400 = vmatpush1.msra.mxu0 %v388
    %401 = vmatprep.subr.mxu0 0.0
    %402 = vmatpush1.msra.mxu0 %v387
    %403 = vmatprep.subr.mxu0 0.0
    %404 = vmatpush1.msra.mxu0 %v386
    %405 = vmatprep.subr.mxu0 0.0
    %406 = vmatpush1.msra.mxu0 %v385
    %407 = vmatprep.subr.mxu0 0.0
    %408 = vmatpush1.msra.mxu0 %v384
    %409 = vmatprep.subr.mxu0 0.0
    %410 = vmatpush1.msra.mxu0 %v383
    %411 = vmatprep.subr.mxu0 0.0
    %412 = vmatpush1.msra.mxu0 %v382
    %413 = vmatprep.subr.mxu0 0.0
    %414 = vmatpush1.msra.mxu0 %v381
    %415 = vmatprep.subr.mxu0 0.0
    %416 = vmatpush1.msra.mxu0 %v380
    %417 = vmatprep.subr.mxu0 0.0
    %418 = vmatpush1.msra.mxu0 %v379
    %419 = vmatprep.subr.mxu0 0.0
    %420 = vmatpush1.msra.mxu0 %v378
    %421 = vmatprep.subr.mxu0 0.0
    %422 = vmatpush1.msra.mxu0 %v377
    %423 = vmatprep.subr.mxu0 0.0
    %424 = vmatpush1.msra.mxu0 %v376
    %425 = vmatprep.subr.mxu0 0.0
    %426 = vmatpush1.msra.mxu0 %v375
    %427 = vmatprep.subr.mxu0 0.0
    %428 = vmatpush1.msra.mxu0 %v374
    %429 = vmatprep.subr.mxu0 0.0
    %430 = vmatpush2.msra.mxu0 0.0
    %431 = vmatprep.subr.mxu0 0.0
    %432 = vmatpush2.msra.mxu0 0.0
    %433 = vmatprep.subr.mxu0 0.0
    %434 = vmatpush2.msra.mxu0 0.0
    %435 = vmatprep.subr.mxu0 0.0
    %436 = vmatpush2.msra.mxu0 0.0
    %437 = vmatprep.subr.mxu0 0.0
    %438 = vmatpush2.msra.mxu0 0.0
    %439 = vmatprep.subr.mxu0 0.0
    %440 = vmatpush2.msra.mxu0 0.0
    %441 = vmatprep.subr.mxu0 0.0
    %442 = vmatpush2.msra.mxu0 0.0
    %443 = vmatprep.subr.mxu0 0.0
    %444 = vmatpush2.msra.mxu0 0.0
    %445 = vmatprep.subr.mxu0 0.0
    %446 = vmatpush2.msra.mxu0 0.0
    %447 = vmatprep.subr.mxu0 0.0
    %448 = vmatpush2.msra.mxu0 0.0
    %449 = vmatprep.subr.mxu0 0.0
    %450 = vmatpush2.msra.mxu0 0.0
    %451 = vmatprep.subr.mxu0 0.0
    %452 = vmatpush2.msra.mxu0 0.0
    %453 = vmatprep.subr.mxu0 0.0
    %454 = vmatpush2.msra.mxu0 0.0
    %455 = vmatprep.subr.mxu0 0.0
    %456 = vmatpush2.msra.mxu0 0.0
    %457 = vmatprep.subr.mxu0 0.0
    %458 = vmatpush2.msra.mxu0 0.0
    %459 = vmatprep.subr.mxu0 0.0
    %460 = vmatpush2.msra.mxu0 0.0
    %461 = vmatprep.mubr.f32.mxu0 0.0
    %462 = vmatmul.mubr.f32.gmra.mxu0 %v373
    %v463 = vpop.f32.mrf.mxu0
    %v464 = vadd.f32 %v395, %v463
    %v465 = vpop.f32.mrf.mxu0
    %466 = vdwg.mxu0
    %v467 = vmax.f32 %v464, 0.0
    %v468 = vadd.f32 %v467, %v373
    %s469 = scalar_lea.vmem [#allocation4], 128
    %v470 = vld [vmem:[%s469] sm:$0xff]
    %v471 = vld [vmem:[%s469 + $0x8] sm:$0xff]
    %v472 = vld [vmem:[%s469 + $0x10] sm:$0xff]
    %v473 = vld [vmem:[%s469 + $0x18] sm:$0xff]
    %v474 = vld [vmem:[%s469 + $0x20] sm:$0xff]
    %v475 = vld [vmem:[%s469 + $0x28] sm:$0xff]
    %v476 = vld [vmem:[%s469 + $0x30] sm:$0xff]
    %v477 = vld [vmem:[%s469 + $0x38] sm:$0xff]
    %v478 = vld [vmem:[%s469 + $0x40] sm:$0xff]
    %v479 = vld [vmem:[%s469 + $0x48] sm:$0xff]
    %v480 = vld [vmem:[%s469 + $0x50] sm:$0xff]
    %v481 = vld [vmem:[%s469 + $0x58] sm:$0xff]
    %v482 = vld [vmem:[%s469 + $0x60] sm:$0xff]
    %v483 = vld [vmem:[%s469 + $0x68] sm:$0xff]
    %v484 = vld [vmem:[%s469 + $0x70] sm:$0xff]
    %v485 = vld [vmem:[%s469 + $0x78] sm:$0xff]
    %s486 = scalar_lea.vmem %s4, 1
    %v487 = vld [vmem:[%s486] sm:$0x1]
    %v489 = vlaneseq
    %v490 = vshrl.u32 %v489, 7
    %v491 = vsub.s32 0, %v490
    %v492 = vrot.slane %v487, %v491
    %494 = vmatprep.subr.mxu0 0.0
    %495 = vmatpush1.msra.mxu0 %v485
    %496 = vmatprep.subr.mxu0 0.0
    %497 = vmatpush1.msra.mxu0 %v484
    %498 = vmatprep.subr.mxu0 0.0
    %499 = vmatpush1.msra.mxu0 %v483
    %500 = vmatprep.subr.mxu0 0.0
    %501 = vmatpush1.msra.mxu0 %v482
    %502 = vmatprep.subr.mxu0 0.0
    %503 = vmatpush1.msra.mxu0 %v481
    %504 = vmatprep.subr.mxu0 0.0
    %505 = vmatpush1.msra.mxu0 %v480
    %506 = vmatprep.subr.mxu0 0.0
    %507 = vmatpush1.msra.mxu0 %v479
    %508 = vmatprep.subr.mxu0 0.0
    %509 = vmatpush1.msra.mxu0 %v478
    %510 = vmatprep.subr.mxu0 0.0
    %511 = vmatpush1.msra.mxu0 %v477
    %512 = vmatprep.subr.mxu0 0.0
    %513 = vmatpush1.msra.mxu0 %v476
    %514 = vmatprep.subr.mxu0 0.0
    %515 = vmatpush1.msra.mxu0 %v475
    %516 = vmatprep.subr.mxu0 0.0
    %517 = vmatpush1.msra.mxu0 %v474
    %518 = vmatprep.subr.mxu0 0.0
    %519 = vmatpush1.msra.mxu0 %v473
    %520 = vmatprep.subr.mxu0 0.0
    %521 = vmatpush1.msra.mxu0 %v472
    %522 = vmatprep.subr.mxu0 0.0
    %523 = vmatpush1.msra.mxu0 %v471
    %524 = vmatprep.subr.mxu0 0.0
    %525 = vmatpush1.msra.mxu0 %v470
    %526 = vmatprep.subr.mxu0 0.0
    %527 = vmatpush2.msra.mxu0 0.0
    %528 = vmatprep.subr.mxu0 0.0
    %529 = vmatpush2.msra.mxu0 0.0
    %530 = vmatprep.subr.mxu0 0.0
    %531 = vmatpush2.msra.mxu0 0.0
    %532 = vmatprep.subr.mxu0 0.0
    %533 = vmatpush2.msra.mxu0 0.0
    %534 = vmatprep.subr.mxu0 0.0
    %535 = vmatpush2.msra.mxu0 0.0
    %536 = vmatprep.subr.mxu0 0.0
    %537 = vmatpush2.msra.mxu0 0.0
    %538 = vmatprep.subr.mxu0 0.0
    %539 = vmatpush2.msra.mxu0 0.0
    %540 = vmatprep.subr.mxu0 0.0
    %541 = vmatpush2.msra.mxu0 0.0
    %542 = vmatprep.subr.mxu0 0.0
    %543 = vmatpush2.msra.mxu0 0.0
    %544 = vmatprep.subr.mxu0 0.0
    %545 = vmatpush2.msra.mxu0 0.0
    %546 = vmatprep.subr.mxu0 0.0
    %547 = vmatpush2.msra.mxu0 0.0
    %548 = vmatprep.subr.mxu0 0.0
    %549 = vmatpush2.msra.mxu0 0.0
    %550 = vmatprep.subr.mxu0 0.0
    %551 = vmatpush2.msra.mxu0 0.0
    %552 = vmatprep.subr.mxu0 0.0
    %553 = vmatpush2.msra.mxu0 0.0
    %554 = vmatprep.subr.mxu0 0.0
    %555 = vmatpush2.msra.mxu0 0.0
    %556 = vmatprep.subr.mxu0 0.0
    %557 = vmatpush2.msra.mxu0 0.0
    %558 = vmatprep.mubr.f32.mxu0 0.0
    %559 = vmatmul.mubr.f32.gmra.mxu0 %v468
    %v560 = vpop.f32.mrf.mxu0
    %v561 = vadd.f32 %v492, %v560
    %v562 = vpop.f32.mrf.mxu0
    %563 = vdwg.mxu0
    %v564 = vmax.f32 %v561, 0.0
    %v565 = vadd.f32 %v564, %v468
    %s566 = scalar_lea.vmem [#allocation4], 256
    %v567 = vld [vmem:[%s566] sm:$0xff]
    %v568 = vld [vmem:[%s566 + $0x8] sm:$0xff]
    %v569 = vld [vmem:[%s566 + $0x10] sm:$0xff]
    %v570 = vld [vmem:[%s566 + $0x18] sm:$0xff]
    %v571 = vld [vmem:[%s566 + $0x20] sm:$0xff]
    %v572 = vld [vmem:[%s566 + $0x28] sm:$0xff]
    %v573 = vld [vmem:[%s566 + $0x30] sm:$0xff]
    %v574 = vld [vmem:[%s566 + $0x38] sm:$0xff]
    %v575 = vld [vmem:[%s566 + $0x40] sm:$0xff]
    %v576 = vld [vmem:[%s566 + $0x48] sm:$0xff]
    %v577 = vld [vmem:[%s566 + $0x50] sm:$0xff]
    %v578 = vld [vmem:[%s566 + $0x58] sm:$0xff]
    %v579 = vld [vmem:[%s566 + $0x60] sm:$0xff]
    %v580 = vld [vmem:[%s566 + $0x68] sm:$0xff]
    %v581 = vld [vmem:[%s566 + $0x70] sm:$0xff]
    %v582 = vld [vmem:[%s566 + $0x78] sm:$0xff]
    %s583 = scalar_lea.vmem %s4, 2
    %v584 = vld [vmem:[%s583] sm:$0x1]
    %v586 = vlaneseq
    %v587 = vshrl.u32 %v586, 7
    %v588 = vsub.s32 0, %v587
    %v589 = vrot.slane %v584, %v588
    %591 = vmatprep.subr.mxu0 0.0
    %592 = vmatpush1.msra.mxu0 %v582
    %593 = vmatprep.subr.mxu0 0.0
    %594 = vmatpush1.msra.mxu0 %v581
    %595 = vmatprep.subr.mxu0 0.0
    %596 = vmatpush1.msra.mxu0 %v580
    %597 = vmatprep.subr.mxu0 0.0
    %598 = vmatpush1.msra.mxu0 %v579
    %599 = vmatprep.subr.mxu0 0.0
    %600 = vmatpush1.msra.mxu0 %v578
    %601 = vmatprep.subr.mxu0 0.0
    %602 = vmatpush1.msra.mxu0 %v577
    %603 = vmatprep.subr.mxu0 0.0
    %604 = vmatpush1.msra.mxu0 %v576
    %605 = vmatprep.subr.mxu0 0.0
    %606 = vmatpush1.msra.mxu0 %v575
    %607 = vmatprep.subr.mxu0 0.0
    %608 = vmatpush1.msra.mxu0 %v574
    %609 = vmatprep.subr.mxu0 0.0
    %610 = vmatpush1.msra.mxu0 %v573
    %611 = vmatprep.subr.mxu0 0.0
    %612 = vmatpush1.msra.mxu0 %v572
    %613 = vmatprep.subr.mxu0 0.0
    %614 = vmatpush1.msra.mxu0 %v571
    %615 = vmatprep.subr.mxu0 0.0
    %616 = vmatpush1.msra.mxu0 %v570
    %617 = vmatprep.subr.mxu0 0.0
    %618 = vmatpush1.msra.mxu0 %v569
    %619 = vmatprep.subr.mxu0 0.0
    %620 = vmatpush1.msra.mxu0 %v568
    %621 = vmatprep.subr.mxu0 0.0
    %622 = vmatpush1.msra.mxu0 %v567
    %623 = vmatprep.subr.mxu0 0.0
    %624 = vmatpush2.msra.mxu0 0.0
    %625 = vmatprep.subr.mxu0 0.0
    %626 = vmatpush2.msra.mxu0 0.0
    %627 = vmatprep.subr.mxu0 0.0
    %628 = vmatpush2.msra.mxu0 0.0
    %629 = vmatprep.subr.mxu0 0.0
    %630 = vmatpush2.msra.mxu0 0.0
    %631 = vmatprep.subr.mxu0 0.0
    %632 = vmatpush2.msra.mxu0 0.0
    %633 = vmatprep.subr.mxu0 0.0
    %634 = vmatpush2.msra.mxu0 0.0
    %635 = vmatprep.subr.mxu0 0.0
    %636 = vmatpush2.msra.mxu0 0.0
    %637 = vmatprep.subr.mxu0 0.0
    %638 = vmatpush2.msra.mxu0 0.0
    %639 = vmatprep.subr.mxu0 0.0
    %640 = vmatpush2.msra.mxu0 0.0
    %641 = vmatprep.subr.mxu0 0.0
    %642 = vmatpush2.msra.mxu0 0.0
    %643 = vmatprep.subr.mxu0 0.0
    %644 = vmatpush2.msra.mxu0 0.0
    %645 = vmatprep.subr.mxu0 0.0
    %646 = vmatpush2.msra.mxu0 0.0
    %647 = vmatprep.subr.mxu0 0.0
    %648 = vmatpush2.msra.mxu0 0.0
    %649 = vmatprep.subr.mxu0 0.0
    %650 = vmatpush2.msra.mxu0 0.0
    %651 = vmatprep.subr.mxu0 0.0
    %652 = vmatpush2.msra.mxu0 0.0
    %653 = vmatprep.subr.mxu0 0.0
    %654 = vmatpush2.msra.mxu0 0.0
    %655 = vmatprep.mubr.f32.mxu0 0.0
    %656 = vmatmul.mubr.f32.gmra.mxu0 %v565
    %v657 = vpop.f32.mrf.mxu0
    %v658 = vadd.f32 %v589, %v657
    %v659 = vpop.f32.mrf.mxu0
    %660 = vdwg.mxu0
    %v661 = vmax.f32 %v658, 0.0
    %v662 = vadd.f32 %v661, %v565
    %v663 = vld [vmem:[%s5] sm:$0xff]
    %v664 = vld [vmem:[%s5 + $0x8] sm:$0xff]
    %v665 = vld [vmem:[%s5 + $0x10] sm:$0xff]
    %v666 = vld [vmem:[%s5 + $0x18] sm:$0xff]
    %v667 = vld [vmem:[%s5 + $0x20] sm:$0xff]
    %v668 = vld [vmem:[%s5 + $0x28] sm:$0xff]
    %v669 = vld [vmem:[%s5 + $0x30] sm:$0xff]
    %v670 = vld [vmem:[%s5 + $0x38] sm:$0xff]
    %v671 = vld [vmem:[%s5 + $0x40] sm:$0xff]
    %v672 = vld [vmem:[%s5 + $0x48] sm:$0xff]
    %v673 = vld [vmem:[%s5 + $0x50] sm:$0xff]
    %v674 = vld [vmem:[%s5 + $0x58] sm:$0xff]
    %v675 = vld [vmem:[%s5 + $0x60] sm:$0xff]
    %v676 = vld [vmem:[%s5 + $0x68] sm:$0xff]
    %v677 = vld [vmem:[%s5 + $0x70] sm:$0xff]
    %v678 = vld [vmem:[%s5 + $0x78] sm:$0xff]
    %v679 = vld [vmem:[%s6] sm:$0x1]
    %v681 = vlaneseq
    %v682 = vshrl.u32 %v681, 7
    %v683 = vsub.s32 0, %v682
    %v684 = vrot.slane %v679, %v683
    %686 = vmatprep.subr.mxu0 0.0
    %687 = vmatpush1.msra.mxu0 %v678
    %688 = vmatprep.subr.mxu0 0.0
    %689 = vmatpush1.msra.mxu0 %v677
    %690 = vmatprep.subr.mxu0 0.0
    %691 = vmatpush1.msra.mxu0 %v676
    %692 = vmatprep.subr.mxu0 0.0
    %693 = vmatpush1.msra.mxu0 %v675
    %694 = vmatprep.subr.mxu0 0.0
    %695 = vmatpush1.msra.mxu0 %v674
    %696 = vmatprep.subr.mxu0 0.0
    %697 = vmatpush1.msra.mxu0 %v673
    %698 = vmatprep.subr.mxu0 0.0
    %699 = vmatpush1.msra.mxu0 %v672
    %700 = vmatprep.subr.mxu0 0.0
    %701 = vmatpush1.msra.mxu0 %v671
    %702 = vmatprep.subr.mxu0 0.0
    %703 = vmatpush1.msra.mxu0 %v670
    %704 = vmatprep.subr.mxu0 0.0
    %705 = vmatpush1.msra.mxu0 %v669
    %706 = vmatprep.subr.mxu0 0.0
    %707 = vmatpush1.msra.mxu0 %v668
    %708 = vmatprep.subr.mxu0 0.0
    %709 = vmatpush1.msra.mxu0 %v667
    %710 = vmatprep.subr.mxu0 0.0
    %711 = vmatpush1.msra.mxu0 %v666
    %712 = vmatprep.subr.mxu0 0.0
    %713 = vmatpush1.msra.mxu0 %v665
    %714 = vmatprep.subr.mxu0 0.0
    %715 = vmatpush1.msra.mxu0 %v664
    %716 = vmatprep.subr.mxu0 0.0
    %717 = vmatpush1.msra.mxu0 %v663
    %718 = vmatprep.subr.mxu0 0.0
    %719 = vmatpush2.msra.mxu0 0.0
    %720 = vmatprep.subr.mxu0 0.0
    %721 = vmatpush2.msra.mxu0 0.0
    %722 = vmatprep.subr.mxu0 0.0
    %723 = vmatpush2.msra.mxu0 0.0
    %724 = vmatprep.subr.mxu0 0.0
    %725 = vmatpush2.msra.mxu0 0.0
    %726 = vmatprep.subr.mxu0 0.0
    %727 = vmatpush2.msra.mxu0 0.0
    %728 = vmatprep.subr.mxu0 0.0
    %729 = vmatpush2.msra.mxu0 0.0
    %730 = vmatprep.subr.mxu0 0.0
    %731 = vmatpush2.msra.mxu0 0.0
    %732 = vmatprep.subr.mxu0 0.0
    %733 = vmatpush2.msra.mxu0 0.0
    %734 = vmatprep.subr.mxu0 0.0
    %735 = vmatpush2.msra.mxu0 0.0
    %736 = vmatprep.subr.mxu0 0.0
    %737 = vmatpush2.msra.mxu0 0.0
    %738 = vmatprep.subr.mxu0 0.0
    %739 = vmatpush2.msra.mxu0 0.0
    %740 = vmatprep.subr.mxu0 0.0
    %741 = vmatpush2.msra.mxu0 0.0
    %742 = vmatprep.subr.mxu0 0.0
    %743 = vmatpush2.msra.mxu0 0.0
    %744 = vmatprep.subr.mxu0 0.0
    %745 = vmatpush2.msra.mxu0 0.0
    %746 = vmatprep.subr.mxu0 0.0
    %747 = vmatpush2.msra.mxu0 0.0
    %748 = vmatprep.subr.mxu0 0.0
    %749 = vmatpush2.msra.mxu0 0.0
    %750 = vmatprep.mubr.f32.mxu0 0.0
    %751 = vmatmul.mubr.f32.gmra.mxu0 %v662
    %v752 = vpop.f32.mrf.mxu0
    %v753 = vadd.f32 %v684, %v752
    %v754 = vpop.f32.mrf.mxu0
    %755 = vdwg.mxu0
    %756 = vst [vmem:[%s7] sm:$0xff] %v753
    // Predicated region
    $region38: #{mlp_deep_residual_forward.1} parent=1 // pred_check
      _
    $region39: #{mlp_deep_residual_forward.1} parent=1 // pred_check_branch
      %758 = sbr.rel (0) target = $region41
    $region40: #{mlp_deep_residual_forward.1} parent=1 // pred_region
      _
    $region41: #{mlp_deep_residual_forward.1} parent=1 // pred_fallthru
      _
    // Predicated region
    $region42: #{mlp_deep_residual_forward.1} parent=1 // pred_check
      _
    $region43: #{mlp_deep_residual_forward.1} parent=1 // pred_check_branch
      %760 = sbr.rel (0) target = $region45
    $region44: #{mlp_deep_residual_forward.1} parent=1 // pred_region
      _
    $region45: #{mlp_deep_residual_forward.1} parent=1 // pred_fallthru
      _
    %761 = vsyncpa [#allocation3], 1
    %762 = vsyncpa [#allocation5], 1

</llo_original>
